<compile_context>
chip_gen: v5e
topology: v5e:2x2
jax: 0.10.0
libtpu: 0.0.40
codegen_flags: <defaults>
</compile_context>

<pallas_src>
import functools

import jax
import jax.numpy as jnp
from jax.experimental import pallas as pl
from jax.experimental.pallas import tpu as pltpu

NUM_CONV_LAYERS = 3
BN_EPS = 1e-5
LANE = 128


def _round_up(x, m):
    return ((x + m - 1) // m) * m


# ----------------------------- Pallas kernel --------------------------------
def _resgcn_kernel(graph_ref, param_ref, out_ref, *, n, fk, hp, nl, bp):
    """Whole-forward kernel.  BN affines pre-folded into weights/biases.

    graph_ref : (2n + bp + 16, 128) f32
                rows [0,n)      x        (cols >= num_feat are zero)
                rows [n,2n)     A_hat    (cols >= n are zero)
                rows [2n,2n+bp) pool     (cols >= n are zero)
                rows [2n+bp,..) bias rows (f32, class-mask baked into row 8)
    param_ref : (fk + (nl+2)*hp, hp) bf16 weight slab, 16-row aligned blocks
    out_ref   : (bp, hp) f32
    """
    f32 = jnp.float32
    boff = 2 * n + bp

    def bias(k):  # per-use (1, hp) f32 row load right before the add
        return graph_ref[boff + k: boff + k + 1, :]

    x = graph_ref[0:n, 0:fk]                      # (n, fk)
    a = graph_ref[n:2 * n, 0:n]                   # (n, n)
    pool = graph_ref[2 * n:2 * n + bp, 0:n]       # (bp, n)

    # bn_feat + conv_feat (gfn=True: feature transform, no conv bias) + relu
    w_feat = param_ref[0:fk, :].astype(f32)       # (fk, hp)
    x = jnp.maximum(
        jnp.dot(x, w_feat, preferred_element_type=f32) + bias(0), 0.0)

    off = fk
    for i in range(nl):
        # bns_conv[i] folded into W_i (scale) and the pre-propagation bias row
        w_i = param_ref[off + i * hp: off + (i + 1) * hp, :].astype(f32)
        h = jnp.dot(x, w_i, preferred_element_type=f32) + bias(1 + i)
        # propagation + GCN bias (added after A_hat@, as in the reference)
        h = jnp.dot(a, h, preferred_element_type=f32) + bias(1 + nl + i)
        x = jnp.maximum(h, 0.0)

    # global_add_pool as a (bp,n)@(n,hp) matmul
    g = jnp.dot(pool, x, preferred_element_type=f32)          # (bp, hp)

    # bns_fc[0] folded into W_lin; relu
    off_lin = off + nl * hp
    w_lin = param_ref[off_lin:off_lin + hp, :].astype(f32)
    g = jnp.maximum(
        jnp.dot(g, w_lin, preferred_element_type=f32) + bias(2 * nl + 1), 0.0)

    # bn_hidden folded into W_cls; classifier.  Padded-class lanes are masked
    # to -1e30 directly in the packed bias row -> no iota/where here.
    off_cls = off_lin + hp
    w_cls = param_ref[off_cls:off_cls + hp, :].astype(f32)
    logits = jnp.dot(g, w_cls, preferred_element_type=f32) + bias(2 * nl + 2)

    m = jnp.max(logits, axis=-1, keepdims=True)
    z = logits - m
    lse = jnp.log(jnp.sum(jnp.exp(z), axis=-1, keepdims=True))
    out_ref[...] = z - lse


# ------------------------------ JAX wrapper ----------------------------------
def resgcn_forward(graph, w_slab, *, n_p, b_p, num_feat, hidden, num_classes,
                   num_graphs):
    hp = _round_up(hidden, LANE)
    fk = _round_up(num_feat, 16)
    nl = NUM_CONV_LAYERS

    kernel = functools.partial(_resgcn_kernel, n=n_p, fk=fk, hp=hp, nl=nl,
                               bp=b_p)

    flops = 2 * (n_p * fk * hp + nl * (n_p * hp * hp + n_p * n_p * hp)
                 + b_p * n_p * hp + 2 * b_p * hp * hp)
    bytes_accessed = (w_slab.size * w_slab.dtype.itemsize
                      + graph.size * 4 + b_p * hp * 4)

    vmem = pl.BlockSpec(memory_space=pltpu.MemorySpace.VMEM)
    out = pl.pallas_call(
        kernel,
        out_shape=jax.ShapeDtypeStruct((b_p, hp), jnp.float32),
        in_specs=[vmem, vmem],
        out_specs=vmem,
        cost_estimate=pl.CostEstimate(flops=flops,
                                      transcendentals=b_p * hp + b_p,
                                      bytes_accessed=bytes_accessed),
    )(graph, w_slab)
    return out[:num_graphs, :num_classes]


# ------------------------- parameter fold & pack -----------------------------
def _pad2d(a, rows, cols):
    r, c = a.shape
    return jnp.pad(a, ((0, rows - r), (0, cols - c)))


def fold_and_pack(params, num_feat, hidden, num_classes):
    """Fold eval-mode BN affines; pack weights (bf16) and bias rows (f32)."""
    L = NUM_CONV_LAYERS
    fk = _round_up(num_feat, 16)          # bf16 sublane-tile aligned block
    hp = _round_up(hidden, LANE)
    assert num_classes <= hp and hidden <= LANE and num_feat <= LANE

    # bn_feat into conv_feat (gfn): y = (x*s + t) @ W = x @ (s*W) + t@W
    s, t = params["bn_feat"]
    w_feat = s[:, None] * params["w_feat"]
    b_feat = t[None, :] @ params["w_feat"]

    w_blocks = [_pad2d(w_feat, fk, hp)]
    pre_rows, post_rows = [], []
    sc, tc = params["bn_conv"]
    for i in range(L):
        w_i = params["w_conv"][i]
        w_blocks.append(_pad2d(sc[i][:, None] * w_i, hp, hp))
        pre_rows.append(_pad2d(tc[i][None, :] @ w_i, 1, hp))
        post_rows.append(_pad2d(params["b_conv"][i][None, :], 1, hp))

    s, t = params["bn_fc"]
    w_lin = s[:, None] * params["w_lin"]
    b_lin = t[None, :] @ params["w_lin"] + params["b_lin"][None, :]
    w_blocks.append(_pad2d(w_lin, hp, hp))

    s, t = params["bn_hidden"]
    w_cls = s[:, None] * params["w_cls"]
    b_cls = t[None, :] @ params["w_cls"] + params["b_cls"][None, :]
    w_blocks.append(_pad2d(w_cls, hp, hp))

    # Static class-pad mask baked into the classifier bias row (stays f32,
    # so -1e30 is safe and the kernel needs no iota/where).
    lane = jnp.arange(hp)
    b_cls_row = jnp.where(lane[None, :] < num_classes,
                          _pad2d(b_cls, 1, hp), -1e30)

    w_slab = jnp.concatenate(w_blocks, axis=0).astype(jnp.bfloat16)

    b_rows = ([_pad2d(b_feat, 1, hp)] + pre_rows + post_rows
              + [_pad2d(b_lin, 1, hp), b_cls_row])
    b_block = jnp.concatenate(b_rows, axis=0)            # (2L+3, hp)
    pad_to = _round_up(b_block.shape[0], 8)
    b_block = jnp.pad(b_block, ((0, pad_to - b_block.shape[0]), (0, 0)))
    return w_slab, b_block                               # bf16, f32


def pack_graph(x, a_hat, pool, b_block, *, num_feat):
    """Pack x, A_hat, pool and bias rows into one lane-dense f32 slab."""
    N = x.shape[0]
    B = pool.shape[0]
    assert N <= LANE
    n_p = _round_up(N, 8)
    b_p = _round_up(max(B, 8), 8)
    xg = jnp.zeros((n_p, LANE), jnp.float32).at[:N, :num_feat].set(x)
    ag = jnp.zeros((n_p, LANE), jnp.float32).at[:N, :N].set(a_hat)
    pg = jnp.zeros((b_p, LANE), jnp.float32).at[:B, :N].set(pool)
    graph = jnp.concatenate([xg, ag, pg, b_block], axis=0)
    return graph, n_p, b_p


# ------------------------------- glue helpers --------------------------------
def build_norm_adj(edge_index, num_nodes):
    """A_hat = D^{-1/2} (A + I) D^{-1/2}, edge weights = 1 (GCNConv.norm)."""
    row, col = edge_index
    a = jnp.zeros((num_nodes, num_nodes), jnp.float32).at[row, col].add(1.0)
    a = a + jnp.eye(num_nodes, dtype=jnp.float32)     # add_self_loops(fill=1)
    deg = jnp.sum(a, axis=1)
    dinv = 1.0 / jnp.sqrt(deg)
    dinv = jnp.where(jnp.isinf(dinv), 0.0, dinv)
    return a * dinv[:, None] * dinv[None, :]


def build_pool_matrix(batch, num_graphs):
    """One-hot (B, N) matrix implementing global_add_pool as a matmul."""
    return (batch[None, :] == jnp.arange(num_graphs)[:, None]).astype(jnp.float32)


def glorot(key, shape):
    fan_in, fan_out = shape[-2], shape[-1]
    lim = jnp.sqrt(6.0 / (fan_in + fan_out))
    return jax.random.uniform(key, shape, jnp.float32, -lim, lim)


def bn_affine(num_ch):
    """Eval-mode BN with running stats (0,1), weight=1, bias=1e-4."""
    scale = jnp.full((num_ch,), 1.0 / jnp.sqrt(1.0 + BN_EPS), jnp.float32)
    shift = jnp.full((num_ch,), 1e-4, jnp.float32)
    return scale, shift


def init_params(key, num_feat, hidden, num_classes):
    keys = jax.random.split(key, 6)
    bnc_s, bnc_b = bn_affine(hidden)
    return {
        "bn_feat": bn_affine(num_feat),
        "w_feat": glorot(keys[0], (num_feat, hidden)),
        "bn_conv": (jnp.stack([bnc_s] * NUM_CONV_LAYERS),
                    jnp.stack([bnc_b] * NUM_CONV_LAYERS)),
        "w_conv": glorot(keys[1], (NUM_CONV_LAYERS, hidden, hidden)),
        "b_conv": jnp.zeros((NUM_CONV_LAYERS, hidden), jnp.float32),
        "bn_fc": bn_affine(hidden),
        "w_lin": glorot(keys[2], (hidden, hidden)),
        "b_lin": 0.01 * jax.random.normal(keys[3], (hidden,), jnp.float32),
        "bn_hidden": bn_affine(hidden),
        "w_cls": glorot(keys[4], (hidden, num_classes)),
        "b_cls": 0.01 * jax.random.normal(keys[5], (num_classes,), jnp.float32),
    }


def reference_forward(x, a_hat, pool, params):
    """Pure-JAX f32 reference matching the original module order (eval BN)."""
    hi = jax.lax.Precision.HIGHEST
    s, t = params["bn_feat"]
    x = x * s + t
    x = jax.nn.relu(jnp.dot(x, params["w_feat"], precision=hi))
    sc, tc = params["bn_conv"]
    for i in range(NUM_CONV_LAYERS):
        h = x * sc[i] + tc[i]
        h = jnp.dot(h, params["w_conv"][i], precision=hi)
        h = jnp.dot(a_hat, h, precision=hi) + params["b_conv"][i]
        x = jax.nn.relu(h)
    g = jnp.dot(pool, x, precision=hi)
    s, t = params["bn_fc"]
    g = jax.nn.relu(jnp.dot(g * s + t, params["w_lin"], precision=hi)
                    + params["b_lin"])
    s, t = params["bn_hidden"]
    logits = jnp.dot(g * s + t, params["w_cls"], precision=hi) + params["b_cls"]
    return jax.nn.log_softmax(logits, axis=-1)


def slab_reference(graph, w_slab, *, n, fk, hp, nl, bp):
    """Pure-JAX mirror of the kernel math on the packed (bf16-stored) slabs."""
    hi = jax.lax.Precision.HIGHEST
    w = w_slab.astype(jnp.float32)
    boff = 2 * n + bp
    bias = lambda k: graph[boff + k: boff + k + 1, :]
    x = graph[0:n, 0:fk]
    a = graph[n:2 * n, 0:n]
    pool = graph[2 * n:2 * n + bp, 0:n]
    x = jax.nn.relu(jnp.dot(x, w[0:fk], precision=hi) + bias(0))
    off = fk
    for i in range(nl):
        h = jnp.dot(x, w[off + i * hp: off + (i + 1) * hp], precision=hi) + bias(1 + i)
        h = jnp.dot(a, h, precision=hi) + bias(1 + nl + i)
        x = jax.nn.relu(h)
    g = jnp.dot(pool, x, precision=hi)
    off_lin = off + nl * hp
    g = jax.nn.relu(jnp.dot(g, w[off_lin:off_lin + hp], precision=hi)
                    + bias(2 * nl + 1))
    off_cls = off_lin + hp
    logits = jnp.dot(g, w[off_cls:off_cls + hp], precision=hi) + bias(2 * nl + 2)
    return jax.nn.log_softmax(logits, axis=-1)


def ring_edges(lo, hi):
    n = hi - lo
    src = [lo + i for i in range(n)]
    dst = [lo + (i + 1) % n for i in range(n)]
    return src + dst, dst + src  # both directions


# --------------------------------- main ---------------------------------------
if __name__ == "__main__":
    key = jax.random.PRNGKey(0)
    k_x, k_p = jax.random.split(key)

    # Small synthetic "batch of 2 graphs": 16 nodes, 8 input features,
    # hidden=32, 4 classes.
    num_nodes, num_feat, hidden, num_classes, num_graphs = 16, 8, 32, 4, 2

    batch = jnp.array([0] * 7 + [1] * 9, dtype=jnp.int32)           # (N,)
    s0, d0 = ring_edges(0, 7)
    s1, d1 = ring_edges(7, 16)
    edge_index = jnp.array([s0 + s1, d0 + d1], dtype=jnp.int32)     # (2, E=32)

    x = jax.random.normal(k_x, (num_nodes, num_feat), jnp.float32)  # data.x

    a_hat = build_norm_adj(edge_index, num_nodes)                   # (N, N)
    pool = build_pool_matrix(batch, num_graphs)                     # (B, N)
    params = init_params(k_p, num_feat, hidden, num_classes)

    w_slab, b_block = fold_and_pack(params, num_feat, hidden, num_classes)
    graph, n_p, b_p = pack_graph(x, a_hat, pool, b_block, num_feat=num_feat)

    out = resgcn_forward(graph, w_slab, n_p=n_p, b_p=b_p,
                         num_feat=num_feat, hidden=hidden,
                         num_classes=num_classes, num_graphs=num_graphs)
    out = jax.block_until_ready(out)

    assert out.shape == (num_graphs, num_classes)
    assert bool(jnp.all(jnp.isfinite(out)))

    fk = _round_up(num_feat, 16)
    hp = _round_up(hidden, LANE)

    # Tight check: identical math (same bf16-stored weights) in pure JAX ->
    # validates the Pallas lowering / packing / bias indexing exactly.
    ref_slab = slab_reference(graph, w_slab, n=n_p, fk=fk, hp=hp,
                              nl=NUM_CONV_LAYERS, bp=b_p)[:num_graphs, :num_classes]
    ref_slab = jax.block_until_ready(ref_slab)
    assert bool(jnp.allclose(out, ref_slab, atol=2e-3, rtol=2e-3)), (out, ref_slab)

    # Loose check vs the exact f32 module reference -> bounds the bf16
    # weight-storage rounding accumulated across the 8 chained matmuls.
    ref = jax.block_until_ready(reference_forward(x, a_hat, pool, params))
    assert bool(jnp.allclose(out, ref, atol=1e-1, rtol=1e-2)), (out, ref)

    print("KERNEL_OK")
</pallas_src>

<mosaic_0001>
module attributes {stable_mosaic.version = 11 : i64} {
  func.func @_resgcn_kernel(%arg0: memref<56x128xf32, #tpu.memory_space<vmem>>, %arg1: memref<656x128xbf16, #tpu.memory_space<vmem>>, %arg2: memref<8x128xf32, #tpu.memory_space<vmem>>) attributes {dimension_semantics = [], scalar_prefetch = 0 : i64, scratch_operands = 0 : i64, tpu.core_type = #tpu.core_type<tc>} {
    %c0 = arith.constant 0 : index
    %c0_0 = arith.constant 0 : index
    %0 = vector.load %arg0[%c0, %c0_0] : memref<56x128xf32, #tpu.memory_space<vmem>>, vector<16x16xf32>
    %c16 = arith.constant 16 : index
    %c0_1 = arith.constant 0 : index
    %1 = vector.load %arg0[%c16, %c0_1] : memref<56x128xf32, #tpu.memory_space<vmem>>, vector<16x16xf32>
    %c32 = arith.constant 32 : index
    %c0_2 = arith.constant 0 : index
    %2 = vector.load %arg0[%c32, %c0_2] : memref<56x128xf32, #tpu.memory_space<vmem>>, vector<8x16xf32>
    %c0_3 = arith.constant 0 : index
    %c0_4 = arith.constant 0 : index
    %3 = vector.load %arg1[%c0_3, %c0_4] : memref<656x128xbf16, #tpu.memory_space<vmem>>, vector<16x128xbf16>
    %4 = arith.extf %3 : vector<16x128xbf16> to vector<16x128xf32>
    %cst = arith.constant dense<0.000000e+00> : vector<16x128xf32>
    %5 = tpu.matmul %0, %4, %cst {dimension_numbers = #tpu.dot_dimension_numbers<[1], [0], [0], [1], [0, 0, 1, 1], [], []>} : vector<16x16xf32>, vector<16x128xf32>, vector<16x128xf32> -> vector<16x128xf32>
    %c40 = arith.constant 40 : index
    %c0_5 = arith.constant 0 : index
    %6 = vector.load %arg0[%c40, %c0_5] : memref<56x128xf32, #tpu.memory_space<vmem>>, vector<1x128xf32>
    %7 = vector.broadcast %6 : vector<1x128xf32> to vector<16x128xf32>
    %8 = arith.addf %5, %7 : vector<16x128xf32>
    %cst_6 = arith.constant 0.000000e+00 : f32
    %9 = vector.broadcast %cst_6 : f32 to vector<16x128xf32>
    %10 = arith.maximumf %8, %9 : vector<16x128xf32>
    %c16_7 = arith.constant 16 : index
    %c0_8 = arith.constant 0 : index
    %11 = vector.load %arg1[%c16_7, %c0_8] : memref<656x128xbf16, #tpu.memory_space<vmem>>, vector<128x128xbf16>
    %12 = arith.extf %11 : vector<128x128xbf16> to vector<128x128xf32>
    %cst_9 = arith.constant dense<0.000000e+00> : vector<16x128xf32>
    %13 = tpu.matmul %10, %12, %cst_9 {dimension_numbers = #tpu.dot_dimension_numbers<[1], [0], [0], [1], [0, 0, 1, 1], [], []>} : vector<16x128xf32>, vector<128x128xf32>, vector<16x128xf32> -> vector<16x128xf32>
    %c41 = arith.constant 41 : index
    %c0_10 = arith.constant 0 : index
    %14 = vector.load %arg0[%c41, %c0_10] : memref<56x128xf32, #tpu.memory_space<vmem>>, vector<1x128xf32>
    %15 = vector.broadcast %14 : vector<1x128xf32> to vector<16x128xf32>
    %16 = arith.addf %13, %15 : vector<16x128xf32>
    %cst_11 = arith.constant dense<0.000000e+00> : vector<16x128xf32>
    %17 = tpu.matmul %1, %16, %cst_11 {dimension_numbers = #tpu.dot_dimension_numbers<[1], [0], [0], [1], [0, 0, 1, 1], [], []>} : vector<16x16xf32>, vector<16x128xf32>, vector<16x128xf32> -> vector<16x128xf32>
    %c44 = arith.constant 44 : index
    %c0_12 = arith.constant 0 : index
    %18 = vector.load %arg0[%c44, %c0_12] : memref<56x128xf32, #tpu.memory_space<vmem>>, vector<1x128xf32>
    %19 = vector.broadcast %18 : vector<1x128xf32> to vector<16x128xf32>
    %20 = arith.addf %17, %19 : vector<16x128xf32>
    %cst_13 = arith.constant 0.000000e+00 : f32
    %21 = vector.broadcast %cst_13 : f32 to vector<16x128xf32>
    %22 = arith.maximumf %20, %21 : vector<16x128xf32>
    %c144 = arith.constant 144 : index
    %c0_14 = arith.constant 0 : index
    %23 = vector.load %arg1[%c144, %c0_14] : memref<656x128xbf16, #tpu.memory_space<vmem>>, vector<128x128xbf16>
    %24 = arith.extf %23 : vector<128x128xbf16> to vector<128x128xf32>
    %cst_15 = arith.constant dense<0.000000e+00> : vector<16x128xf32>
    %25 = tpu.matmul %22, %24, %cst_15 {dimension_numbers = #tpu.dot_dimension_numbers<[1], [0], [0], [1], [0, 0, 1, 1], [], []>} : vector<16x128xf32>, vector<128x128xf32>, vector<16x128xf32> -> vector<16x128xf32>
    %c42 = arith.constant 42 : index
    %c0_16 = arith.constant 0 : index
    %26 = vector.load %arg0[%c42, %c0_16] : memref<56x128xf32, #tpu.memory_space<vmem>>, vector<1x128xf32>
    %27 = vector.broadcast %26 : vector<1x128xf32> to vector<16x128xf32>
    %28 = arith.addf %25, %27 : vector<16x128xf32>
    %cst_17 = arith.constant dense<0.000000e+00> : vector<16x128xf32>
    %29 = tpu.matmul %1, %28, %cst_17 {dimension_numbers = #tpu.dot_dimension_numbers<[1], [0], [0], [1], [0, 0, 1, 1], [], []>} : vector<16x16xf32>, vector<16x128xf32>, vector<16x128xf32> -> vector<16x128xf32>
    %c45 = arith.constant 45 : index
    %c0_18 = arith.constant 0 : index
    %30 = vector.load %arg0[%c45, %c0_18] : memref<56x128xf32, #tpu.memory_space<vmem>>, vector<1x128xf32>
    %31 = vector.broadcast %30 : vector<1x128xf32> to vector<16x128xf32>
    %32 = arith.addf %29, %31 : vector<16x128xf32>
    %cst_19 = arith.constant 0.000000e+00 : f32
    %33 = vector.broadcast %cst_19 : f32 to vector<16x128xf32>
    %34 = arith.maximumf %32, %33 : vector<16x128xf32>
    %c272 = arith.constant 272 : index
    %c0_20 = arith.constant 0 : index
    %35 = vector.load %arg1[%c272, %c0_20] : memref<656x128xbf16, #tpu.memory_space<vmem>>, vector<128x128xbf16>
    %36 = arith.extf %35 : vector<128x128xbf16> to vector<128x128xf32>
    %cst_21 = arith.constant dense<0.000000e+00> : vector<16x128xf32>
    %37 = tpu.matmul %34, %36, %cst_21 {dimension_numbers = #tpu.dot_dimension_numbers<[1], [0], [0], [1], [0, 0, 1, 1], [], []>} : vector<16x128xf32>, vector<128x128xf32>, vector<16x128xf32> -> vector<16x128xf32>
    %c43 = arith.constant 43 : index
    %c0_22 = arith.constant 0 : index
    %38 = vector.load %arg0[%c43, %c0_22] : memref<56x128xf32, #tpu.memory_space<vmem>>, vector<1x128xf32>
    %39 = vector.broadcast %38 : vector<1x128xf32> to vector<16x128xf32>
    %40 = arith.addf %37, %39 : vector<16x128xf32>
    %cst_23 = arith.constant dense<0.000000e+00> : vector<16x128xf32>
    %41 = tpu.matmul %1, %40, %cst_23 {dimension_numbers = #tpu.dot_dimension_numbers<[1], [0], [0], [1], [0, 0, 1, 1], [], []>} : vector<16x16xf32>, vector<16x128xf32>, vector<16x128xf32> -> vector<16x128xf32>
    %c46 = arith.constant 46 : index
    %c0_24 = arith.constant 0 : index
    %42 = vector.load %arg0[%c46, %c0_24] : memref<56x128xf32, #tpu.memory_space<vmem>>, vector<1x128xf32>
    %43 = vector.broadcast %42 : vector<1x128xf32> to vector<16x128xf32>
    %44 = arith.addf %41, %43 : vector<16x128xf32>
    %cst_25 = arith.constant 0.000000e+00 : f32
    %45 = vector.broadcast %cst_25 : f32 to vector<16x128xf32>
    %46 = arith.maximumf %44, %45 : vector<16x128xf32>
    %cst_26 = arith.constant dense<0.000000e+00> : vector<8x128xf32>
    %47 = tpu.matmul %2, %46, %cst_26 {dimension_numbers = #tpu.dot_dimension_numbers<[1], [0], [0], [1], [0, 0, 1, 1], [], []>} : vector<8x16xf32>, vector<16x128xf32>, vector<8x128xf32> -> vector<8x128xf32>
    %c400 = arith.constant 400 : index
    %c0_27 = arith.constant 0 : index
    %48 = vector.load %arg1[%c400, %c0_27] : memref<656x128xbf16, #tpu.memory_space<vmem>>, vector<128x128xbf16>
    %49 = arith.extf %48 : vector<128x128xbf16> to vector<128x128xf32>
    %cst_28 = arith.constant dense<0.000000e+00> : vector<8x128xf32>
    %50 = tpu.matmul %47, %49, %cst_28 {dimension_numbers = #tpu.dot_dimension_numbers<[1], [0], [0], [1], [0, 0, 1, 1], [], []>} : vector<8x128xf32>, vector<128x128xf32>, vector<8x128xf32> -> vector<8x128xf32>
    %c47 = arith.constant 47 : index
    %c0_29 = arith.constant 0 : index
    %51 = vector.load %arg0[%c47, %c0_29] : memref<56x128xf32, #tpu.memory_space<vmem>>, vector<1x128xf32>
    %52 = vector.broadcast %51 : vector<1x128xf32> to vector<8x128xf32>
    %53 = arith.addf %50, %52 : vector<8x128xf32>
    %cst_30 = arith.constant 0.000000e+00 : f32
    %54 = vector.broadcast %cst_30 : f32 to vector<8x128xf32>
    %55 = arith.maximumf %53, %54 : vector<8x128xf32>
    %c528 = arith.constant 528 : index
    %c0_31 = arith.constant 0 : index
    %56 = vector.load %arg1[%c528, %c0_31] : memref<656x128xbf16, #tpu.memory_space<vmem>>, vector<128x128xbf16>
    %57 = arith.extf %56 : vector<128x128xbf16> to vector<128x128xf32>
    %cst_32 = arith.constant dense<0.000000e+00> : vector<8x128xf32>
    %58 = tpu.matmul %55, %57, %cst_32 {dimension_numbers = #tpu.dot_dimension_numbers<[1], [0], [0], [1], [0, 0, 1, 1], [], []>} : vector<8x128xf32>, vector<128x128xf32>, vector<8x128xf32> -> vector<8x128xf32>
    %c48 = arith.constant 48 : index
    %c0_33 = arith.constant 0 : index
    %59 = vector.load %arg0[%c48, %c0_33] : memref<56x128xf32, #tpu.memory_space<vmem>>, vector<1x128xf32>
    %60 = vector.broadcast %59 : vector<1x128xf32> to vector<8x128xf32>
    %61 = arith.addf %58, %60 : vector<8x128xf32>
    %cst_34 = arith.constant dense<0xFF800000> : vector<8xf32>
    %62 = vector.multi_reduction <maximumf>, %61, %cst_34 [1] : vector<8x128xf32> to vector<8xf32>
    %63 = vector.shape_cast %62 : vector<8xf32> to vector<8x1xf32>
    %64 = vector.broadcast %63 : vector<8x1xf32> to vector<8x128xf32>
    %65 = arith.subf %61, %64 : vector<8x128xf32>
    %66 = math.exp %65 : vector<8x128xf32>
    %cst_35 = arith.constant dense<0.000000e+00> : vector<8xf32>
    %67 = vector.multi_reduction <add>, %66, %cst_35 [1] : vector<8x128xf32> to vector<8xf32>
    %68 = vector.shape_cast %67 : vector<8xf32> to vector<8x1xf32>
    %69 = math.log %68 : vector<8x1xf32>
    %70 = vector.broadcast %69 : vector<8x1xf32> to vector<8x128xf32>
    %71 = arith.subf %65, %70 : vector<8x128xf32>
    %c0_36 = arith.constant 0 : index
    %c0_37 = arith.constant 0 : index
    %72 = vector.load %arg2[%c0_36, %c0_37] : memref<8x128xf32, #tpu.memory_space<vmem>>, vector<8x128xf32>
    tpu.vector_store %arg2[%c0_36, %c0_37], %71 {strides = array<i32>} : memref<8x128xf32, #tpu.memory_space<vmem>>, vector<8x128xf32>,
    return
  }
}

</mosaic_0001>

<llo_original>
// kernel: tpu_custom_call.1
$region0: #{tpu_custom_call.1}
  #allocation0 [shape = 'u32[]', space=smem, size = 0x4, offset = 0x4, fixed_abs, tag = 'smem constant byte address 0x4 - core index']
  #allocation1 [shape = 'u32[72,128]{1,0:T(1,128)}', space=vmem, size = 0x9000, scoped, tag = 'internal scratch']
  %s0 = inlined_call_operand.hbm [shape: f32[56,128], index: 0, kind: input, shape index: {}]
  %s1 = inlined_call_operand.hbm [shape: bf16[656,128], index: 1, kind: input, shape index: {}]
  %s2 = inlined_call_operand.hbm [shape: f32[8,128], index: 2, kind: output, shape index: {}]
  %s3 = sld [smem:[#allocation0]]
  $region26: #{tpu_custom_call.1} parent=0
    _
  %s5 = ssub.s32 1, %s3
  %s6 = scalar_select 0, %s5, %s3
  $region1: #{tpu_custom_call.1} parent=0
    #allocation2 [shape = 'u8[28672]{0}', space=vmem, size = 0x7000, scoped, tag = 'input window, operand 0, single buffered']
    #allocation3 [shape = 's32[1]{0}', space=sflag, size = 0x4, scoped, tag = 'scoped memory for tpu_custom_call.1']
    #allocation4 [shape = 's32[1]{0}', space=sflag, size = 0x4, scoped, tag = 'scoped memory for tpu_custom_call.1']
    #allocation5 [shape = 'u8[167936]{0}', space=vmem, size = 0x29000, scoped, tag = 'input window, operand 1, single buffered']
    #allocation6 [shape = 's32[1]{0}', space=sflag, size = 0x4, scoped, tag = 'scoped memory for tpu_custom_call.1']
    #allocation7 [shape = 'u8[4096]{0}', space=vmem, size = 0x1000, scoped, tag = 'output window, operand 0, single buffered']
    %7 = vsyncpa [#allocation3], 0
    %8 = vsyncpa [#allocation6], 0
    %9 = vsyncpa [#allocation4], 0
    // Predicated region
    $region2: #{tpu_custom_call.1} parent=1 // pred_check
      _
    $region3: #{tpu_custom_call.1} parent=1 // pred_check_branch
      %11 = sbr.rel (0) target = $region5
    $region4: #{tpu_custom_call.1} parent=1 // pred_region
      %13 = vsyncadd [#allocation3], 0
      %s14 = sshll.u32 %s0, 4
      %s15 = int_to_ptr.hbm [resolvable:$true] %s14
      %s16 = sshll.u32 [#allocation2], 4
      %s17 = int_to_ptr.vmem [resolvable:$true] %s16
      %22 = dma.hbm_to_vmem [thread:$0]  %s15, 896, %s17, [#allocation3], 128, 128, 8
    $region5: #{tpu_custom_call.1} parent=1 // pred_fallthru
      _
    // Predicated region
    $region6: #{tpu_custom_call.1} parent=1 // pred_check
      _
    $region7: #{tpu_custom_call.1} parent=1 // pred_check_branch
      %24 = sbr.rel (0) target = $region9
    $region8: #{tpu_custom_call.1} parent=1 // pred_region
      %26 = vsyncadd [#allocation6], 0
      %s27 = sshll.u32 %s1, 4
      %s28 = int_to_ptr.hbm [resolvable:$true] %s27
      %s29 = sshll.u32 [#allocation5], 4
      %s30 = int_to_ptr.vmem [resolvable:$true] %s29
      %35 = dma.hbm_to_vmem [thread:$0]  %s28, 5248, %s30, [#allocation6], 64, 64, 4
    $region9: #{tpu_custom_call.1} parent=1 // pred_fallthru
      _
    // Predicated region
    $region10: #{tpu_custom_call.1} parent=1 // pred_check
      _
    $region11: #{tpu_custom_call.1} parent=1 // pred_check_branch
      %37 = sbr.rel (0) target = $region13
    $region12: #{tpu_custom_call.1} parent=1 // pred_region
      %39 = dma.done [#allocation3], 896
    $region13: #{tpu_custom_call.1} parent=1 // pred_fallthru
      _
    // Predicated region
    $region14: #{tpu_custom_call.1} parent=1 // pred_check
      _
    $region15: #{tpu_custom_call.1} parent=1 // pred_check_branch
      %41 = sbr.rel (0) target = $region17
    $region16: #{tpu_custom_call.1} parent=1 // pred_region
      %43 = dma.done [#allocation6], 5248
    $region17: #{tpu_custom_call.1} parent=1 // pred_fallthru
      _
    %v44 = vld [vmem:[#allocation2] sm:$0xff]
    %v45 = vld [vmem:[#allocation2 + $0x8] sm:$0xff]
    %v46 = vld [vmem:[#allocation2 + $0x10] sm:$0xff]
    %v47 = vld [vmem:[#allocation2 + $0x18] sm:$0xff]
    %v48 = vld [vmem:[#allocation2 + $0x20] sm:$0xff]
    %v49 = vld [vmem:[#allocation5] sm:$0xf]
    %v50 = vld [vmem:[#allocation5 + $0x4] sm:$0xf]
    %v51 = vunpack.c.l.bf16 %v49
    %v52 = vunpack.c.l.bf16 %v50
    %v53 = vld [vmem:[#allocation2 + $0x28] sm:$0x1]
    %v54 = vperm.slane %v53, 0
    %vm55 = vcmask 130048
    %v57 = vsel %vm55, %v44, 0
    %v60 = vsel %vm55, %v45, 0
    %62 = vmatpush.msra.mxu0 0.0
    %63 = vmatpush.msra.mxu0 0.0
    %64 = vmatpush.msra.mxu0 0.0
    %65 = vmatpush.msra.mxu0 0.0
    %66 = vmatpush.msra.mxu0 0.0
    %67 = vmatpush.msra.mxu0 0.0
    %68 = vmatpush.msra.mxu0 0.0
    %69 = vmatpush.msra.mxu0 0.0
    %70 = vmatpush.msra.mxu0 0.0
    %71 = vmatpush.msra.mxu0 0.0
    %72 = vmatpush.msra.mxu0 0.0
    %73 = vmatpush.msra.mxu0 0.0
    %74 = vmatpush.msra.mxu0 0.0
    %75 = vmatpush.msra.mxu0 0.0
    %76 = vmatpush.msra.mxu0 %v52
    %77 = vmatpush.msra.mxu0 %v51
    %78 = vmatmul.f32.gmra.mxu0 %v57
    %v79 = vpop.f32.mrf.mxu0
    %v80 = vadd.f32 %v54, %v79
    %81 = vmatmul.f32.gmra.mxu0 %v60
    %v82 = vpop.f32.mrf.mxu0
    %v83 = vadd.f32 %v54, %v82
    %84 = vdwg.mxu0
    %v85 = vmax.f32 %v80, 0.0
    %v86 = vmax.f32 %v83, 0.0
    %v87 = vld [vmem:[#allocation5 + $0x8] sm:$0xf]
    %v88 = vld [vmem:[#allocation5 + $0xc] sm:$0xf]
    %v89 = vld [vmem:[#allocation5 + $0x10] sm:$0xf]
    %v90 = vld [vmem:[#allocation5 + $0x14] sm:$0xf]
    %v91 = vld [vmem:[#allocation5 + $0x18] sm:$0xf]
    %v92 = vld [vmem:[#allocation5 + $0x1c] sm:$0xf]
    %v93 = vld [vmem:[#allocation5 + $0x20] sm:$0xf]
    %v94 = vld [vmem:[#allocation5 + $0x24] sm:$0xf]
    %v95 = vld [vmem:[#allocation5 + $0x28] sm:$0xf]
    %v96 = vld [vmem:[#allocation5 + $0x2c] sm:$0xf]
    %v97 = vld [vmem:[#allocation5 + $0x30] sm:$0xf]
    %v98 = vld [vmem:[#allocation5 + $0x34] sm:$0xf]
    %v99 = vld [vmem:[#allocation5 + $0x38] sm:$0xf]
    %v100 = vld [vmem:[#allocation5 + $0x3c] sm:$0xf]
    %v101 = vld [vmem:[#allocation5 + $0x40] sm:$0xf]
    %v102 = vld [vmem:[#allocation5 + $0x44] sm:$0xf]
    %v103 = vunpack.c.l.bf16 %v87
    %v104 = vunpack.c.l.bf16 %v88
    %v105 = vunpack.c.l.bf16 %v89
    %v106 = vunpack.c.l.bf16 %v90
    %v107 = vunpack.c.l.bf16 %v91
    %v108 = vunpack.c.l.bf16 %v92
    %v109 = vunpack.c.l.bf16 %v93
    %v110 = vunpack.c.l.bf16 %v94
    %v111 = vunpack.c.l.bf16 %v95
    %v112 = vunpack.c.l.bf16 %v96
    %v113 = vunpack.c.l.bf16 %v97
    %v114 = vunpack.c.l.bf16 %v98
    %v115 = vunpack.c.l.bf16 %v99
    %v116 = vunpack.c.l.bf16 %v100
    %v117 = vunpack.c.l.bf16 %v101
    %v118 = vunpack.c.l.bf16 %v102
    %v119 = vld [vmem:[#allocation2 + $0x29] sm:$0x1]
    %v120 = vperm.slane %v119, 0
    %121 = vmatpush.msra.mxu0 %v118
    %122 = vmatpush.msra.mxu0 %v117
    %123 = vmatpush.msra.mxu0 %v116
    %124 = vmatpush.msra.mxu0 %v115
    %125 = vmatpush.msra.mxu0 %v114
    %126 = vmatpush.msra.mxu0 %v113
    %127 = vmatpush.msra.mxu0 %v112
    %128 = vmatpush.msra.mxu0 %v111
    %129 = vmatpush.msra.mxu0 %v110
    %130 = vmatpush.msra.mxu0 %v109
    %131 = vmatpush.msra.mxu0 %v108
    %132 = vmatpush.msra.mxu0 %v107
    %133 = vmatpush.msra.mxu0 %v106
    %134 = vmatpush.msra.mxu0 %v105
    %135 = vmatpush.msra.mxu0 %v104
    %136 = vmatpush.msra.mxu0 %v103
    %137 = vmatmul.f32.gmra.mxu0 %v85
    %v138 = vpop.f32.mrf.mxu0
    %v139 = vadd.f32 %v120, %v138
    %140 = vmatmul.f32.gmra.mxu0 %v86
    %v141 = vpop.f32.mrf.mxu0
    %v142 = vadd.f32 %v120, %v141
    %143 = vdwg.mxu0
    %v144 = vld [vmem:[#allocation2 + $0x2c] sm:$0x1]
    %v145 = vperm.slane %v144, 0
    %v147 = vsel %vm55, %v46, 0
    %v150 = vsel %vm55, %v47, 0
    %152 = vmatpush.msra.mxu0 0.0
    %153 = vmatpush.msra.mxu0 0.0
    %154 = vmatpush.msra.mxu0 0.0
    %155 = vmatpush.msra.mxu0 0.0
    %156 = vmatpush.msra.mxu0 0.0
    %157 = vmatpush.msra.mxu0 0.0
    %158 = vmatpush.msra.mxu0 0.0
    %159 = vmatpush.msra.mxu0 0.0
    %160 = vmatpush.msra.mxu0 0.0
    %161 = vmatpush.msra.mxu0 0.0
    %162 = vmatpush.msra.mxu0 0.0
    %163 = vmatpush.msra.mxu0 0.0
    %164 = vmatpush.msra.mxu0 0.0
    %165 = vmatpush.msra.mxu0 0.0
    %166 = vmatpush.msra.mxu0 %v142
    %167 = vmatpush.msra.mxu0 %v139
    %168 = vmatmul.f32.gmra.mxu0 %v147
    %v169 = vpop.f32.mrf.mxu0
    %v170 = vadd.f32 %v145, %v169
    %171 = vmatmul.f32.gmra.mxu0 %v150
    %v172 = vpop.f32.mrf.mxu0
    %v173 = vadd.f32 %v145, %v172
    %174 = vdwg.mxu0
    %v175 = vmax.f32 %v170, 0.0
    %v176 = vmax.f32 %v173, 0.0
    %v177 = vld [vmem:[#allocation5 + $0x48] sm:$0xf]
    %v178 = vld [vmem:[#allocation5 + $0x4c] sm:$0xf]
    %v179 = vld [vmem:[#allocation5 + $0x50] sm:$0xf]
    %v180 = vld [vmem:[#allocation5 + $0x54] sm:$0xf]
    %v181 = vld [vmem:[#allocation5 + $0x58] sm:$0xf]
    %v182 = vld [vmem:[#allocation5 + $0x5c] sm:$0xf]
    %v183 = vld [vmem:[#allocation5 + $0x60] sm:$0xf]
    %v184 = vld [vmem:[#allocation5 + $0x64] sm:$0xf]
    %v185 = vld [vmem:[#allocation5 + $0x68] sm:$0xf]
    %v186 = vld [vmem:[#allocation5 + $0x6c] sm:$0xf]
    %v187 = vld [vmem:[#allocation5 + $0x70] sm:$0xf]
    %v188 = vld [vmem:[#allocation5 + $0x74] sm:$0xf]
    %v189 = vld [vmem:[#allocation5 + $0x78] sm:$0xf]
    %v190 = vld [vmem:[#allocation5 + $0x7c] sm:$0xf]
    %v191 = vld [vmem:[#allocation5 + $0x80] sm:$0xf]
    %v192 = vld [vmem:[#allocation5 + $0x84] sm:$0xf]
    %v193 = vunpack.c.l.bf16 %v177
    %v194 = vunpack.c.l.bf16 %v178
    %v195 = vunpack.c.l.bf16 %v179
    %v196 = vunpack.c.l.bf16 %v180
    %v197 = vunpack.c.l.bf16 %v181
    %v198 = vunpack.c.l.bf16 %v182
    %v199 = vunpack.c.l.bf16 %v183
    %v200 = vunpack.c.l.bf16 %v184
    %v201 = vunpack.c.l.bf16 %v185
    %v202 = vunpack.c.l.bf16 %v186
    %v203 = vunpack.c.l.bf16 %v187
    %v204 = vunpack.c.l.bf16 %v188
    %v205 = vunpack.c.l.bf16 %v189
    %v206 = vunpack.c.l.bf16 %v190
    %v207 = vunpack.c.l.bf16 %v191
    %v208 = vunpack.c.l.bf16 %v192
    %v209 = vld [vmem:[#allocation2 + $0x2a] sm:$0x1]
    %v210 = vperm.slane %v209, 0
    %211 = vmatpush.msra.mxu0 %v208
    %212 = vmatpush.msra.mxu0 %v207
    %213 = vmatpush.msra.mxu0 %v206
    %214 = vmatpush.msra.mxu0 %v205
    %215 = vmatpush.msra.mxu0 %v204
    %216 = vmatpush.msra.mxu0 %v203
    %217 = vmatpush.msra.mxu0 %v202
    %218 = vmatpush.msra.mxu0 %v201
    %219 = vmatpush.msra.mxu0 %v200
    %220 = vmatpush.msra.mxu0 %v199
    %221 = vmatpush.msra.mxu0 %v198
    %222 = vmatpush.msra.mxu0 %v197
    %223 = vmatpush.msra.mxu0 %v196
    %224 = vmatpush.msra.mxu0 %v195
    %225 = vmatpush.msra.mxu0 %v194
    %226 = vmatpush.msra.mxu0 %v193
    %227 = vmatmul.f32.gmra.mxu0 %v175
    %v228 = vpop.f32.mrf.mxu0
    %v229 = vadd.f32 %v210, %v228
    %230 = vmatmul.f32.gmra.mxu0 %v176
    %v231 = vpop.f32.mrf.mxu0
    %v232 = vadd.f32 %v210, %v231
    %233 = vdwg.mxu0
    %v234 = vld [vmem:[#allocation2 + $0x2d] sm:$0x1]
    %v235 = vperm.slane %v234, 0
    %236 = vmatpush.msra.mxu0 0.0
    %237 = vmatpush.msra.mxu0 0.0
    %238 = vmatpush.msra.mxu0 0.0
    %239 = vmatpush.msra.mxu0 0.0
    %240 = vmatpush.msra.mxu0 0.0
    %241 = vmatpush.msra.mxu0 0.0
    %242 = vmatpush.msra.mxu0 0.0
    %243 = vmatpush.msra.mxu0 0.0
    %244 = vmatpush.msra.mxu0 0.0
    %245 = vmatpush.msra.mxu0 0.0
    %246 = vmatpush.msra.mxu0 0.0
    %247 = vmatpush.msra.mxu0 0.0
    %248 = vmatpush.msra.mxu0 0.0
    %249 = vmatpush.msra.mxu0 0.0
    %250 = vmatpush.msra.mxu0 %v232
    %251 = vmatpush.msra.mxu0 %v229
    %252 = vmatmul.f32.gmra.mxu0 %v147
    %v253 = vpop.f32.mrf.mxu0
    %v254 = vadd.f32 %v235, %v253
    %255 = vmatmul.f32.gmra.mxu0 %v150
    %v256 = vpop.f32.mrf.mxu0
    %v257 = vadd.f32 %v235, %v256
    %258 = vdwg.mxu0
    %v259 = vmax.f32 %v254, 0.0
    %v260 = vmax.f32 %v257, 0.0
    %v261 = vld [vmem:[#allocation5 + $0x88] sm:$0xf]
    %v262 = vld [vmem:[#allocation5 + $0x8c] sm:$0xf]
    %v263 = vld [vmem:[#allocation5 + $0x90] sm:$0xf]
    %v264 = vld [vmem:[#allocation5 + $0x94] sm:$0xf]
    %v265 = vld [vmem:[#allocation5 + $0x98] sm:$0xf]
    %v266 = vld [vmem:[#allocation5 + $0x9c] sm:$0xf]
    %v267 = vld [vmem:[#allocation5 + $0xa0] sm:$0xf]
    %v268 = vld [vmem:[#allocation5 + $0xa4] sm:$0xf]
    %v269 = vld [vmem:[#allocation5 + $0xa8] sm:$0xf]
    %v270 = vld [vmem:[#allocation5 + $0xac] sm:$0xf]
    %v271 = vld [vmem:[#allocation5 + $0xb0] sm:$0xf]
    %v272 = vld [vmem:[#allocation5 + $0xb4] sm:$0xf]
    %v273 = vld [vmem:[#allocation5 + $0xb8] sm:$0xf]
    %v274 = vld [vmem:[#allocation5 + $0xbc] sm:$0xf]
    %v275 = vld [vmem:[#allocation5 + $0xc0] sm:$0xf]
    %v276 = vld [vmem:[#allocation5 + $0xc4] sm:$0xf]
    %v277 = vunpack.c.l.bf16 %v261
    %v278 = vunpack.c.l.bf16 %v262
    %v279 = vunpack.c.l.bf16 %v263
    %v280 = vunpack.c.l.bf16 %v264
    %v281 = vunpack.c.l.bf16 %v265
    %v282 = vunpack.c.l.bf16 %v266
    %v283 = vunpack.c.l.bf16 %v267
    %v284 = vunpack.c.l.bf16 %v268
    %v285 = vunpack.c.l.bf16 %v269
    %v286 = vunpack.c.l.bf16 %v270
    %v287 = vunpack.c.l.bf16 %v271
    %v288 = vunpack.c.l.bf16 %v272
    %v289 = vunpack.c.l.bf16 %v273
    %v290 = vunpack.c.l.bf16 %v274
    %v291 = vunpack.c.l.bf16 %v275
    %v292 = vunpack.c.l.bf16 %v276
    %v293 = vld [vmem:[#allocation2 + $0x2b] sm:$0x1]
    %v294 = vperm.slane %v293, 0
    %295 = vmatpush.msra.mxu0 %v292
    %296 = vmatpush.msra.mxu0 %v291
    %297 = vmatpush.msra.mxu0 %v290
    %298 = vmatpush.msra.mxu0 %v289
    %299 = vmatpush.msra.mxu0 %v288
    %300 = vmatpush.msra.mxu0 %v287
    %301 = vmatpush.msra.mxu0 %v286
    %302 = vmatpush.msra.mxu0 %v285
    %303 = vmatpush.msra.mxu0 %v284
    %304 = vmatpush.msra.mxu0 %v283
    %305 = vmatpush.msra.mxu0 %v282
    %306 = vmatpush.msra.mxu0 %v281
    %307 = vmatpush.msra.mxu0 %v280
    %308 = vmatpush.msra.mxu0 %v279
    %309 = vmatpush.msra.mxu0 %v278
    %310 = vmatpush.msra.mxu0 %v277
    %311 = vmatmul.f32.gmra.mxu0 %v259
    %v312 = vpop.f32.mrf.mxu0
    %v313 = vadd.f32 %v294, %v312
    %314 = vmatmul.f32.gmra.mxu0 %v260
    %v315 = vpop.f32.mrf.mxu0
    %v316 = vadd.f32 %v294, %v315
    %317 = vdwg.mxu0
    %v318 = vld [vmem:[#allocation2 + $0x2e] sm:$0x1]
    %v319 = vperm.slane %v318, 0
    %320 = vmatpush.msra.mxu0 0.0
    %321 = vmatpush.msra.mxu0 0.0
    %322 = vmatpush.msra.mxu0 0.0
    %323 = vmatpush.msra.mxu0 0.0
    %324 = vmatpush.msra.mxu0 0.0
    %325 = vmatpush.msra.mxu0 0.0
    %326 = vmatpush.msra.mxu0 0.0
    %327 = vmatpush.msra.mxu0 0.0
    %328 = vmatpush.msra.mxu0 0.0
    %329 = vmatpush.msra.mxu0 0.0
    %330 = vmatpush.msra.mxu0 0.0
    %331 = vmatpush.msra.mxu0 0.0
    %332 = vmatpush.msra.mxu0 0.0
    %333 = vmatpush.msra.mxu0 0.0
    %334 = vmatpush.msra.mxu0 %v316
    %335 = vmatpush.msra.mxu0 %v313
    %336 = vmatmul.f32.gmra.mxu0 %v147
    %v337 = vpop.f32.mrf.mxu0
    %v338 = vadd.f32 %v319, %v337
    %339 = vmatmul.f32.gmra.mxu0 %v150
    %v340 = vpop.f32.mrf.mxu0
    %v341 = vadd.f32 %v319, %v340
    %342 = vdwg.mxu0
    %v343 = vmax.f32 %v338, 0.0
    %v344 = vmax.f32 %v341, 0.0
    %v346 = vsel %vm55, %v48, 0
    %348 = vmatpush.msra.mxu0 0.0
    %349 = vmatpush.msra.mxu0 0.0
    %350 = vmatpush.msra.mxu0 0.0
    %351 = vmatpush.msra.mxu0 0.0
    %352 = vmatpush.msra.mxu0 0.0
    %353 = vmatpush.msra.mxu0 0.0
    %354 = vmatpush.msra.mxu0 0.0
    %355 = vmatpush.msra.mxu0 0.0
    %356 = vmatpush.msra.mxu0 0.0
    %357 = vmatpush.msra.mxu0 0.0
    %358 = vmatpush.msra.mxu0 0.0
    %359 = vmatpush.msra.mxu0 0.0
    %360 = vmatpush.msra.mxu0 0.0
    %361 = vmatpush.msra.mxu0 0.0
    %362 = vmatpush.msra.mxu0 %v344
    %363 = vmatpush.msra.mxu0 %v343
    %364 = vmatmul.f32.gmra.mxu0 %v346
    %v365 = vpop.f32.mrf.mxu0
    %v366 = vadd.f32 0.0, %v365
    %367 = vdwg.mxu0
    %v368 = vld [vmem:[#allocation5 + $0xc8] sm:$0xf]
    %v369 = vld [vmem:[#allocation5 + $0xcc] sm:$0xf]
    %v370 = vld [vmem:[#allocation5 + $0xd0] sm:$0xf]
    %v371 = vld [vmem:[#allocation5 + $0xd4] sm:$0xf]
    %v372 = vld [vmem:[#allocation5 + $0xd8] sm:$0xf]
    %v373 = vld [vmem:[#allocation5 + $0xdc] sm:$0xf]
    %v374 = vld [vmem:[#allocation5 + $0xe0] sm:$0xf]
    %v375 = vld [vmem:[#allocation5 + $0xe4] sm:$0xf]
    %v376 = vld [vmem:[#allocation5 + $0xe8] sm:$0xf]
    %v377 = vld [vmem:[#allocation5 + $0xec] sm:$0xf]
    %v378 = vld [vmem:[#allocation5 + $0xf0] sm:$0xf]
    %v379 = vld [vmem:[#allocation5 + $0xf4] sm:$0xf]
    %v380 = vld [vmem:[#allocation5 + $0xf8] sm:$0xf]
    %v381 = vld [vmem:[#allocation5 + $0xfc] sm:$0xf]
    %v382 = vld [vmem:[#allocation5 + $0x100] sm:$0xf]
    %v383 = vld [vmem:[#allocation5 + $0x104] sm:$0xf]
    %v384 = vunpack.c.l.bf16 %v368
    %v385 = vunpack.c.l.bf16 %v369
    %v386 = vunpack.c.l.bf16 %v370
    %v387 = vunpack.c.l.bf16 %v371
    %v388 = vunpack.c.l.bf16 %v372
    %v389 = vunpack.c.l.bf16 %v373
    %v390 = vunpack.c.l.bf16 %v374
    %v391 = vunpack.c.l.bf16 %v375
    %v392 = vunpack.c.l.bf16 %v376
    %v393 = vunpack.c.l.bf16 %v377
    %v394 = vunpack.c.l.bf16 %v378
    %v395 = vunpack.c.l.bf16 %v379
    %v396 = vunpack.c.l.bf16 %v380
    %v397 = vunpack.c.l.bf16 %v381
    %v398 = vunpack.c.l.bf16 %v382
    %v399 = vunpack.c.l.bf16 %v383
    %v400 = vld [vmem:[#allocation2 + $0x2f] sm:$0x1]
    %v401 = vperm.slane %v400, 0
    %402 = vmatpush.msra.mxu0 %v399
    %403 = vmatpush.msra.mxu0 %v398
    %404 = vmatpush.msra.mxu0 %v397
    %405 = vmatpush.msra.mxu0 %v396
    %406 = vmatpush.msra.mxu0 %v395
    %407 = vmatpush.msra.mxu0 %v394
    %408 = vmatpush.msra.mxu0 %v393
    %409 = vmatpush.msra.mxu0 %v392
    %410 = vmatpush.msra.mxu0 %v391
    %411 = vmatpush.msra.mxu0 %v390
    %412 = vmatpush.msra.mxu0 %v389
    %413 = vmatpush.msra.mxu0 %v388
    %414 = vmatpush.msra.mxu0 %v387
    %415 = vmatpush.msra.mxu0 %v386
    %416 = vmatpush.msra.mxu0 %v385
    %417 = vmatpush.msra.mxu0 %v384
    %418 = vmatmul.f32.gmra.mxu0 %v366
    %v419 = vpop.f32.mrf.mxu0
    %v420 = vadd.f32 %v401, %v419
    %421 = vdwg.mxu0
    %v422 = vmax.f32 %v420, 0.0
    %v423 = vld [vmem:[#allocation5 + $0x108] sm:$0xf]
    %v424 = vld [vmem:[#allocation5 + $0x10c] sm:$0xf]
    %v425 = vld [vmem:[#allocation5 + $0x110] sm:$0xf]
    %v426 = vld [vmem:[#allocation5 + $0x114] sm:$0xf]
    %v427 = vld [vmem:[#allocation5 + $0x118] sm:$0xf]
    %v428 = vld [vmem:[#allocation5 + $0x11c] sm:$0xf]
    %v429 = vld [vmem:[#allocation5 + $0x120] sm:$0xf]
    %v430 = vld [vmem:[#allocation5 + $0x124] sm:$0xf]
    %v431 = vld [vmem:[#allocation5 + $0x128] sm:$0xf]
    %v432 = vld [vmem:[#allocation5 + $0x12c] sm:$0xf]
    %v433 = vld [vmem:[#allocation5 + $0x130] sm:$0xf]
    %v434 = vld [vmem:[#allocation5 + $0x134] sm:$0xf]
    %v435 = vld [vmem:[#allocation5 + $0x138] sm:$0xf]
    %v436 = vld [vmem:[#allocation5 + $0x13c] sm:$0xf]
    %v437 = vld [vmem:[#allocation5 + $0x140] sm:$0xf]
    %v438 = vld [vmem:[#allocation5 + $0x144] sm:$0xf]
    %v439 = vunpack.c.l.bf16 %v423
    %v440 = vunpack.c.l.bf16 %v424
    %v441 = vunpack.c.l.bf16 %v425
    %v442 = vunpack.c.l.bf16 %v426
    %v443 = vunpack.c.l.bf16 %v427
    %v444 = vunpack.c.l.bf16 %v428
    %v445 = vunpack.c.l.bf16 %v429
    %v446 = vunpack.c.l.bf16 %v430
    %v447 = vunpack.c.l.bf16 %v431
    %v448 = vunpack.c.l.bf16 %v432
    %v449 = vunpack.c.l.bf16 %v433
    %v450 = vunpack.c.l.bf16 %v434
    %v451 = vunpack.c.l.bf16 %v435
    %v452 = vunpack.c.l.bf16 %v436
    %v453 = vunpack.c.l.bf16 %v437
    %v454 = vunpack.c.l.bf16 %v438
    %v455 = vld [vmem:[#allocation2 + $0x30] sm:$0x1]
    %v456 = vperm.slane %v455, 0
    %457 = vmatpush.msra.mxu0 %v454
    %458 = vmatpush.msra.mxu0 %v453
    %459 = vmatpush.msra.mxu0 %v452
    %460 = vmatpush.msra.mxu0 %v451
    %461 = vmatpush.msra.mxu0 %v450
    %462 = vmatpush.msra.mxu0 %v449
    %463 = vmatpush.msra.mxu0 %v448
    %464 = vmatpush.msra.mxu0 %v447
    %465 = vmatpush.msra.mxu0 %v446
    %466 = vmatpush.msra.mxu0 %v445
    %467 = vmatpush.msra.mxu0 %v444
    %468 = vmatpush.msra.mxu0 %v443
    %469 = vmatpush.msra.mxu0 %v442
    %470 = vmatpush.msra.mxu0 %v441
    %471 = vmatpush.msra.mxu0 %v440
    %472 = vmatpush.msra.mxu0 %v439
    %473 = vmatmul.f32.gmra.mxu0 %v422
    %v474 = vpop.f32.mrf.mxu0
    %v475 = vadd.f32 %v456, %v474
    %476 = vdwg.mxu0
    %477 = vmax.xlane.f32.xlu0 %v475
    %v478 = vpop.xlane.xlu0 %477
    %v479 = vsub.f32 %v475, %v478
    %v480 = vmul.f32 %v479, 1.442695
    %v481 = vpow.pop %v480
    %482 = vadd.xlane.f32.xlu0 %v481
    %v483 = vpop.xlane.xlu0 %482
    %v484 = vlog2.pop %v483
    %v485 = vmul.f32 %v484, 0.6931472
    %v486 = vsub.f32 %v479, %v485
    %487 = vst [vmem:[#allocation7] sm:$0xff] %v486
    // Predicated region
    $region18: #{tpu_custom_call.1} parent=1 // pred_check
      _
    $region19: #{tpu_custom_call.1} parent=1 // pred_check_branch
      %489 = sbr.rel (0) target = $region21
    $region20: #{tpu_custom_call.1} parent=1 // pred_region
      %491 = vsyncadd [#allocation4], 0
      %s493 = sshll.u32 [#allocation7], 4
      %s494 = int_to_ptr.vmem [resolvable:$true] %s493
      %s495 = sshll.u32 %s2, 4
      %s496 = int_to_ptr.hbm [resolvable:$true] %s495
      %498 = dma.vmem_to_hbm [thread:$0]  %s494, 128, %s496, [#allocation4]
    $region21: #{tpu_custom_call.1} parent=1 // pred_fallthru
      _
    // Predicated region
    $region22: #{tpu_custom_call.1} parent=1 // pred_check
      _
    $region23: #{tpu_custom_call.1} parent=1 // pred_check_branch
      %500 = sbr.rel (0) target = $region25
    $region24: #{tpu_custom_call.1} parent=1 // pred_region
      %502 = dma.done [#allocation4], 128
    $region25: #{tpu_custom_call.1} parent=1 // pred_fallthru
      _
    %503 = vsyncpa [#allocation3], 1
    %504 = vsyncpa [#allocation6], 1
    %505 = vsyncpa [#allocation4], 1

</llo_original>
